<compile_context>
chip_gen: v6e
topology: v6e:2x2x1
jax: 0.10.0
libtpu: 0.0.40
codegen_flags: <defaults>
</compile_context>

<pallas_src>
import numpy as np
import jax
import jax.numpy as jnp
from jax.experimental import pallas as pl
from jax.experimental.pallas import tpu as pltpu


def _round_up(x, m):
    return ((x + m - 1) // m) * m


def _vmem_budget_bytes():
    """3/4 of physical VMEM (<=100 MiB): ~48 MiB on v7x, ~96 MiB on v5e/v6e."""
    cap = 64 * 1024 * 1024          # conservative fallback = v7x per-TC VMEM
    try:
        cap = int(pltpu.get_tpu_info().vmem_capacity_bytes)
    except Exception:
        pass
    return int(min((cap * 3) // 4, 100 * 1024 * 1024))


def _pick_tile_v(n_vox, geoms, batch, budget_bytes):
    """Largest lane-dense voxel tile whose working set fits the VMEM budget.

    geoms: list of (c_pad, p_pad) per level.  Working set = resident bf16
    feature maps (x2 pipeline buffers) + per-tile pf (bf16) / w_eff (f32) /
    const / out blocks (x2 buffers each).
    """
    v_lane = _round_up(n_vox, 128)
    resident = 2 * sum(batch * cp * pp * 2 for cp, pp in geoms)
    best = 128
    for tv in (128, 256, 512, 1024, 2048):
        if tv > v_lane:
            break
        per_tile = sum(pp * tv * 2 + cp * tv * 4 for cp, pp in geoms)
        per_tile += tv * 4 + batch * tv * 4          # const + out blocks
        if resident + 2 * per_tile <= budget_bytes:
            best = tv
    return best


# ----------------------------------------------------------------------------
# Fused kernel: one voxel tile per grid step, all levels accumulated in vregs.
# ----------------------------------------------------------------------------
def _make_fwrf_kernel(num_levels, batch):
    def kernel(*refs):
        # refs = [fm_0, pf_0, w_0, ..., fm_{L-1}, pf_{L-1}, w_{L-1}, const, out]
        out_ref = refs[-1]
        const_ref = refs[-2]
        acc = jnp.zeros(out_ref.shape, jnp.float32)                  # (B, Vt)
        for k in range(num_levels):
            fm_ref, pf_ref, w_ref = refs[3 * k:3 * k + 3]
            # Spatial pooling on the MXU: (B*Cp, Pp) @ (Pp, Vt) -> (B*Cp, Vt).
            # NOTE: if B*Cp is far below the MXU height for a level, the
            # alternative contraction order (weights first, then pf) gives a
            # larger M dim; kept as-is since it also keeps intermediates small.
            r = jnp.dot(fm_ref[...], pf_ref[...],
                        preferred_element_type=jnp.float32)
            # TODO(synk): an optional `_nonlinearity` (None in the module by
            # default) would be applied to `r` here; with a nonlinearity the
            # normalization can no longer be pre-folded into w_eff/const.
            c_pad, vt = w_ref.shape
            # Layout-free row split (c_pad % 8 == 0, vt % 128 == 0), then
            # weight + channel-reduce straight into the (B, Vt) accumulator.
            r3 = r.reshape(batch, c_pad, vt)
            acc = acc + jnp.sum(r3 * w_ref[...][None], axis=1)
        out_ref[...] = acc + const_ref[...]
    return kernel


# ----------------------------------------------------------------------------
# One-time preprocessing (hoisted off the forward path): fold normalization,
# transpose/pad pooling fields, pick tile_v from an explicit VMEM budget.
# ----------------------------------------------------------------------------
def prepare_fwrf_params(pfs, weights, bias, mstm, msts, level_channels, batch,
                        tile_v=None):
    V, F = weights.shape
    f32 = jnp.float32
    w_t = jnp.asarray(weights, f32).T                              # (F, V)
    msts_ = jnp.ones((F, V), f32) if msts is None else jnp.asarray(msts, f32)
    mstm_ = jnp.zeros((F, V), f32) if mstm is None else jnp.asarray(mstm, f32)
    bias_ = jnp.zeros((V,), f32) if bias is None else jnp.asarray(bias, f32)

    w_eff = w_t / msts_                                            # (F, V)
    const = bias_ - jnp.sum(mstm_ * w_eff, axis=0)                 # (V,)

    # Per-level geometry: channels sublane-padded (8), spatial lane-padded (128).
    geoms = []
    for pf, c in zip(pfs, level_channels):
        v_k, h, w = pf.shape
        assert v_k == V and h == w, "pooling fields must be square, (V, H, H)"
        geoms.append((_round_up(c, 8), _round_up(h * w, 128)))

    budget = _vmem_budget_bytes()
    if tile_v is None:
        tile_v = _pick_tile_v(V, geoms, batch, budget)
    assert tile_v % 128 == 0
    v_pad = _round_up(V, tile_v)
    # >= 2 grid steps when it doesn't cost extra padding (v7x: 2 TensorCores).
    while v_pad // tile_v < 2 and tile_v > 128 and v_pad > 128:
        tile_v //= 2
        v_pad = _round_up(V, tile_v)
    pad_v = v_pad - V

    w_eff_p = jnp.pad(w_eff, ((0, 0), (0, pad_v)))                 # (F, Vp)
    const_p = jnp.pad(const, (0, pad_v)).reshape(1, v_pad)         # (1, Vp)

    offsets = np.concatenate([[0], np.cumsum(level_channels)]).astype(int)
    levels = []
    for k, (pf, c, (c_pad, p_pad)) in enumerate(zip(pfs, level_channels, geoms)):
        v_k, h, w = pf.shape
        p = h * w
        # (Pp, Vp) bf16 pooling field: spatial lane-padded, voxel lane-dense.
        pf_t = jnp.pad(jnp.asarray(pf, f32).reshape(V, p).T,
                       ((0, p_pad - p), (0, pad_v))).astype(jnp.bfloat16)
        # Per-level effective weights, channel-padded with zeros: (Cp, Vp) f32.
        w_k = jnp.pad(w_eff_p[offsets[k]:offsets[k + 1], :],
                      ((0, c_pad - c), (0, 0)))
        levels.append(dict(pf_t=pf_t, w_k=w_k, c=c, c_pad=c_pad,
                           p=p, p_pad=p_pad))

    return dict(levels=levels, const=const_p, tile_v=tile_v, v_pad=v_pad,
                n_vox=V, batch=batch, vmem_limit_bytes=budget)


# ----------------------------------------------------------------------------
# Forward pass: single fused pallas_call over voxel tiles.
# ----------------------------------------------------------------------------
def fwrf_voxel_block_forward(fmaps, prep):
    batch = fmaps[0].shape[0]
    assert batch == prep["batch"]
    tile_v, v_pad = prep["tile_v"], prep["v_pad"]

    inputs, in_specs = [], []
    for fm, lvl in zip(fmaps, prep["levels"]):
        b, c, h, w = fm.shape
        p = h * w
        assert c == lvl["c"] and p == lvl["p"]
        c_pad, p_pad = lvl["c_pad"], lvl["p_pad"]
        # TODO(synk): in production, fuse this pad/reshape/bf16 cast into the
        # feature-map producer (_fmaps_fn) so fmaps are written once in the
        # kernel-ready layout instead of an extra HBM round trip here.
        fm3 = jnp.pad(fm.reshape(b, c, p),
                      ((0, 0), (0, c_pad - c), (0, p_pad - p)))
        fm2d = fm3.reshape(b * c_pad, p_pad).astype(jnp.bfloat16)   # (B*Cp, Pp)
        inputs += [fm2d, lvl["pf_t"], lvl["w_k"]]
        in_specs += [
            # Constant block index -> stays VMEM-resident across voxel tiles.
            pl.BlockSpec((b * c_pad, p_pad), lambda j: (0, 0)),
            pl.BlockSpec((p_pad, tile_v), lambda j: (0, j)),
            pl.BlockSpec((c_pad, tile_v), lambda j: (0, j)),
        ]
    inputs.append(prep["const"])
    in_specs.append(pl.BlockSpec((1, tile_v), lambda j: (0, j)))

    out = pl.pallas_call(
        _make_fwrf_kernel(len(fmaps), batch),
        out_shape=jax.ShapeDtypeStruct((batch, v_pad), jnp.float32),
        grid=(v_pad // tile_v,),
        in_specs=in_specs,
        out_specs=pl.BlockSpec((batch, tile_v), lambda j: (0, j)),
        compiler_params=pltpu.CompilerParams(
            dimension_semantics=("parallel",),          # both TCs on v7x
            vmem_limit_bytes=prep["vmem_limit_bytes"]),
    )(*inputs)
    return out[:, :prep["n_vox"]]


# Pure-JAX reference mirroring the PyTorch forward exactly (for verification).
def fwrf_reference(fmaps, pfs, weights, bias, mstm, msts):
    mst = jnp.concatenate(
        [jnp.tensordot(fm, pf, axes=[[2, 3], [1, 2]]) for fm, pf in zip(fmaps, pfs)],
        axis=1)                                            # (B, F, V)
    mst = (mst - mstm[None]) / msts[None]
    return jnp.einsum('bfv,vf->bv', mst, weights) + bias[None]


if __name__ == "__main__":
    key = jax.random.PRNGKey(0)
    B = 2                      # batch
    V = 8                      # voxels (models)
    level_channels = [4, 6]    # channels per feature-map level
    level_res = [16, 8]        # square spatial resolution per level
    F = sum(level_channels)    # total features = 10

    keys = jax.random.split(key, 2 * len(level_channels) + 4)
    ki = iter(range(len(keys)))

    # Synthetic feature maps (what _fmaps_fn(x) would produce), NCHW.
    fmaps = [
        jax.random.normal(keys[next(ki)], (B, c, r, r), dtype=jnp.float32)
        for c, r in zip(level_channels, level_res)
    ]
    # Synthetic pooling fields (stand-in for pnu.make_gaussian_mass_stack),
    # one (V, H_k, H_k) stack per level, deterministic.
    pfs = [
        jax.nn.softmax(
            jax.random.normal(keys[next(ki)], (V, r, r), dtype=jnp.float32).reshape(V, -1),
            axis=-1).reshape(V, r, r)
        for r in level_res
    ]
    weights = jax.random.normal(keys[next(ki)], (V, F), dtype=jnp.float32)
    bias = jax.random.normal(keys[next(ki)], (V,), dtype=jnp.float32)
    mstm = jax.random.normal(keys[next(ki)], (F, V), dtype=jnp.float32)
    msts = jnp.abs(jax.random.normal(keys[next(ki)], (F, V), dtype=jnp.float32)) + 0.5

    prep = prepare_fwrf_params(pfs, weights, bias, mstm, msts,
                               level_channels, batch=B)

    # jit so the pad/reshape/bf16 cast of the fmaps fuses with the kernel call.
    fwd = jax.jit(lambda *fms: fwrf_voxel_block_forward(list(fms), prep))
    out = jax.block_until_ready(fwd(*fmaps))

    ref = fwrf_reference(fmaps, pfs, weights, bias, mstm, msts)
    assert out.shape == (B, V), out.shape
    # Looser tolerance: bf16 MXU operands + pre-folded normalization.
    assert jnp.allclose(out, ref, atol=5e-2, rtol=5e-2), "mismatch vs reference"

    print("KERNEL_OK")
</pallas_src>

<mosaic_0001>
module attributes {stable_mosaic.version = 11 : i64} {
  func.func @kernel(%arg0: i32, %arg1: memref<16x256xbf16, #tpu.memory_space<vmem>>, %arg2: memref<256x128xbf16, #tpu.memory_space<vmem>>, %arg3: memref<8x128xf32, #tpu.memory_space<vmem>>, %arg4: memref<16x128xbf16, #tpu.memory_space<vmem>>, %arg5: memref<128x128xbf16, #tpu.memory_space<vmem>>, %arg6: memref<8x128xf32, #tpu.memory_space<vmem>>, %arg7: memref<1x128xf32, #tpu.memory_space<vmem>>, %arg8: memref<2x128xf32, #tpu.memory_space<vmem>>) attributes {dimension_semantics = [#tpu.dimension_semantics<parallel>], iteration_bounds = array<i64: 1>, scalar_prefetch = 0 : i64, scratch_operands = 0 : i64, tpu.core_type = #tpu.core_type<tc>, window_params = [{pipeline_mode = #tpu.pipeline_mode<synchronous>, transform_indices = @transform_0, window_bounds = array<i64: 16, 256>}, {transform_indices = @transform_1, window_bounds = array<i64: 256, 128>}, {transform_indices = @transform_2, window_bounds = array<i64: 8, 128>}, {pipeline_mode = #tpu.pipeline_mode<synchronous>, transform_indices = @transform_3, window_bounds = array<i64: 16, 128>}, {transform_indices = @transform_4, window_bounds = array<i64: 128, 128>}, {transform_indices = @transform_5, window_bounds = array<i64: 8, 128>}, {transform_indices = @transform_6, window_bounds = array<i64: 1, 128>}, {transform_indices = @transform_7, window_bounds = array<i64: 2, 128>}]} {
    %cst = arith.constant 0.000000e+00 : f32
    %0 = vector.broadcast %cst : f32 to vector<2x128xf32>
    %c0 = arith.constant 0 : index
    %c0_0 = arith.constant 0 : index
    %1 = vector.load %arg1[%c0, %c0_0] : memref<16x256xbf16, #tpu.memory_space<vmem>>, vector<16x256xbf16>
    %c0_1 = arith.constant 0 : index
    %c0_2 = arith.constant 0 : index
    %2 = vector.load %arg2[%c0_1, %c0_2] : memref<256x128xbf16, #tpu.memory_space<vmem>>, vector<256x128xbf16>
    %cst_3 = arith.constant dense<0.000000e+00> : vector<16x128xf32>
    %3 = tpu.matmul %1, %2, %cst_3 {dimension_numbers = #tpu.dot_dimension_numbers<[1], [0], [0], [1], [0, 0, 1, 1], [], []>} : vector<16x256xbf16>, vector<256x128xbf16>, vector<16x128xf32> -> vector<16x128xf32>
    %4 = vector.shape_cast %3 : vector<16x128xf32> to vector<2x8x128xf32>
    %c0_4 = arith.constant 0 : index
    %c0_5 = arith.constant 0 : index
    %5 = vector.load %arg3[%c0_4, %c0_5] : memref<8x128xf32, #tpu.memory_space<vmem>>, vector<8x128xf32>
    %6 = vector.shape_cast %5 : vector<8x128xf32> to vector<1x8x128xf32>
    %7 = vector.broadcast %6 : vector<1x8x128xf32> to vector<2x8x128xf32>
    %8 = arith.mulf %4, %7 : vector<2x8x128xf32>
    %cst_6 = arith.constant dense<0.000000e+00> : vector<2x128xf32>
    %9 = vector.multi_reduction <add>, %8, %cst_6 [1] : vector<2x8x128xf32> to vector<2x128xf32>
    %10 = arith.addf %0, %9 : vector<2x128xf32>
    %c0_7 = arith.constant 0 : index
    %c0_8 = arith.constant 0 : index
    %11 = vector.load %arg4[%c0_7, %c0_8] : memref<16x128xbf16, #tpu.memory_space<vmem>>, vector<16x128xbf16>
    %c0_9 = arith.constant 0 : index
    %c0_10 = arith.constant 0 : index
    %12 = vector.load %arg5[%c0_9, %c0_10] : memref<128x128xbf16, #tpu.memory_space<vmem>>, vector<128x128xbf16>
    %cst_11 = arith.constant dense<0.000000e+00> : vector<16x128xf32>
    %13 = tpu.matmul %11, %12, %cst_11 {dimension_numbers = #tpu.dot_dimension_numbers<[1], [0], [0], [1], [0, 0, 1, 1], [], []>} : vector<16x128xbf16>, vector<128x128xbf16>, vector<16x128xf32> -> vector<16x128xf32>
    %14 = vector.shape_cast %13 : vector<16x128xf32> to vector<2x8x128xf32>
    %c0_12 = arith.constant 0 : index
    %c0_13 = arith.constant 0 : index
    %15 = vector.load %arg6[%c0_12, %c0_13] : memref<8x128xf32, #tpu.memory_space<vmem>>, vector<8x128xf32>
    %16 = vector.shape_cast %15 : vector<8x128xf32> to vector<1x8x128xf32>
    %17 = vector.broadcast %16 : vector<1x8x128xf32> to vector<2x8x128xf32>
    %18 = arith.mulf %14, %17 : vector<2x8x128xf32>
    %cst_14 = arith.constant dense<0.000000e+00> : vector<2x128xf32>
    %19 = vector.multi_reduction <add>, %18, %cst_14 [1] : vector<2x8x128xf32> to vector<2x128xf32>
    %20 = arith.addf %10, %19 : vector<2x128xf32>
    %c0_15 = arith.constant 0 : index
    %c0_16 = arith.constant 0 : index
    %21 = vector.load %arg7[%c0_15, %c0_16] : memref<1x128xf32, #tpu.memory_space<vmem>>, vector<1x128xf32>
    %22 = vector.broadcast %21 : vector<1x128xf32> to vector<2x128xf32>
    %23 = arith.addf %20, %22 : vector<2x128xf32>
    %c0_17 = arith.constant 0 : index
    %c0_18 = arith.constant 0 : index
    %24 = vector.load %arg8[%c0_17, %c0_18] : memref<2x128xf32, #tpu.memory_space<vmem>>, vector<2x128xf32>
    tpu.vector_store %arg8[%c0_17, %c0_18], %23 {strides = array<i32>} : memref<2x128xf32, #tpu.memory_space<vmem>>, vector<2x128xf32>,
    return
  }
  func.func @transform_0(%arg0: i32) -> (i32, i32) {
    %c0_i32 = arith.constant 0 : i32
    %c0_i32_0 = arith.constant 0 : i32
    %c0_i32_1 = arith.constant 0 : i32
    return %c0_i32, %c0_i32_0 : i32, i32
  }
  func.func @transform_1(%arg0: i32) -> (i32, i32) {
    %c0_i32 = arith.constant 0 : i32
    %c0_i32_0 = arith.constant 0 : i32
    return %c0_i32, %arg0 : i32, i32
  }
  func.func @transform_2(%arg0: i32) -> (i32, i32) {
    %c0_i32 = arith.constant 0 : i32
    %c0_i32_0 = arith.constant 0 : i32
    return %c0_i32, %arg0 : i32, i32
  }
  func.func @transform_3(%arg0: i32) -> (i32, i32) {
    %c0_i32 = arith.constant 0 : i32
    %c0_i32_0 = arith.constant 0 : i32
    %c0_i32_1 = arith.constant 0 : i32
    return %c0_i32, %c0_i32_0 : i32, i32
  }
  func.func @transform_4(%arg0: i32) -> (i32, i32) {
    %c0_i32 = arith.constant 0 : i32
    %c0_i32_0 = arith.constant 0 : i32
    return %c0_i32, %arg0 : i32, i32
  }
  func.func @transform_5(%arg0: i32) -> (i32, i32) {
    %c0_i32 = arith.constant 0 : i32
    %c0_i32_0 = arith.constant 0 : i32
    return %c0_i32, %arg0 : i32, i32
  }
  func.func @transform_6(%arg0: i32) -> (i32, i32) {
    %c0_i32 = arith.constant 0 : i32
    %c0_i32_0 = arith.constant 0 : i32
    return %c0_i32, %arg0 : i32, i32
  }
  func.func @transform_7(%arg0: i32) -> (i32, i32) {
    %c0_i32 = arith.constant 0 : i32
    %c0_i32_0 = arith.constant 0 : i32
    return %c0_i32, %arg0 : i32, i32
  }
}

</mosaic_0001>

<llo_original>
// kernel: _lambda_.1
$region0: #{_lambda_.1}
  #allocation0 [shape = 'u32[]', space=smem, size = 0x4, offset = 0x4, fixed_abs, tag = 'smem constant byte address 0x4 - core index']
  #allocation1 [shape = 'u32[144,128]{1,0:T(1,128)}', space=vmem, size = 0x12000, scoped, tag = 'internal scratch']
  %s0 = inlined_call_operand.vmem [shape: bf16[16,256], index: 0, kind: input, shape index: {}]
  %s1 = inlined_call_operand.vmem [shape: bf16[256,128], index: 1, kind: input, shape index: {}]
  %s2 = inlined_call_operand.vmem [shape: f32[8,128], index: 2, kind: input, shape index: {}]
  %s3 = inlined_call_operand.vmem [shape: bf16[16,128], index: 3, kind: input, shape index: {}]
  %s4 = inlined_call_operand.vmem [shape: bf16[128,128], index: 4, kind: input, shape index: {}]
  %s5 = inlined_call_operand.vmem [shape: f32[8,128], index: 5, kind: input, shape index: {}]
  %s6 = inlined_call_operand.vmem [shape: f32[1,128], index: 6, kind: input, shape index: {}]
  %s7 = inlined_call_operand.hbm [shape: f32[2,128], index: 7, kind: output, shape index: {}]
  %s8 = sld [smem:[#allocation0]]
  $region38: #{_lambda_.1} parent=0
    _
  %s10 = ssub.s32 1, %s8
  %s11 = scalar_select 0, %s10, %s8
  $region1: #{_lambda_.1} parent=0
    #allocation2 [shape = 'u8[1024]{0}', space=vmem, size = 0x400, scoped, tag = 'output window, operand 0, single buffered']
    #allocation3 [shape = 's32[1]{0}', space=sflag, size = 0x4, scoped, tag = 'scoped memory for _lambda_.1']
    %12 = vsyncpa [#allocation3], 0
    // Predicated region
    $region2: #{_lambda_.1} parent=1 // pred_check
      _
    $region3: #{_lambda_.1} parent=1 // pred_check_branch
      %14 = sbr.rel (0) target = $region5
    $region4: #{_lambda_.1} parent=1 // pred_region
      _
    $region5: #{_lambda_.1} parent=1 // pred_fallthru
      _
    // Predicated region
    $region6: #{_lambda_.1} parent=1 // pred_check
      _
    $region7: #{_lambda_.1} parent=1 // pred_check_branch
      %16 = sbr.rel (0) target = $region9
    $region8: #{_lambda_.1} parent=1 // pred_region
      _
    $region9: #{_lambda_.1} parent=1 // pred_fallthru
      _
    // Predicated region
    $region10: #{_lambda_.1} parent=1 // pred_check
      _
    $region11: #{_lambda_.1} parent=1 // pred_check_branch
      %18 = sbr.rel (0) target = $region13
    $region12: #{_lambda_.1} parent=1 // pred_region
      _
    $region13: #{_lambda_.1} parent=1 // pred_fallthru
      _
    // Predicated region
    $region14: #{_lambda_.1} parent=1 // pred_check
      _
    $region15: #{_lambda_.1} parent=1 // pred_check_branch
      %20 = sbr.rel (0) target = $region17
    $region16: #{_lambda_.1} parent=1 // pred_region
      _
    $region17: #{_lambda_.1} parent=1 // pred_fallthru
      _
    // Predicated region
    $region18: #{_lambda_.1} parent=1 // pred_check
      _
    $region19: #{_lambda_.1} parent=1 // pred_check_branch
      %22 = sbr.rel (0) target = $region21
    $region20: #{_lambda_.1} parent=1 // pred_region
      _
    $region21: #{_lambda_.1} parent=1 // pred_fallthru
      _
    // Predicated region
    $region22: #{_lambda_.1} parent=1 // pred_check
      _
    $region23: #{_lambda_.1} parent=1 // pred_check_branch
      %24 = sbr.rel (0) target = $region25
    $region24: #{_lambda_.1} parent=1 // pred_region
      _
    $region25: #{_lambda_.1} parent=1 // pred_fallthru
      _
    // Predicated region
    $region26: #{_lambda_.1} parent=1 // pred_check
      _
    $region27: #{_lambda_.1} parent=1 // pred_check_branch
      %26 = sbr.rel (0) target = $region29
    $region28: #{_lambda_.1} parent=1 // pred_region
      _
    $region29: #{_lambda_.1} parent=1 // pred_fallthru
      _
    %v28 = vld [vmem:[%s0] sm:$0xff]
    %v29 = vld [vmem:[%s0 + $0x8] sm:$0xff]
    %v30 = vld [vmem:[%s1] sm:$0xf]
    %v31 = vld [vmem:[%s1 + $0x4] sm:$0xf]
    %v32 = vld [vmem:[%s1 + $0x8] sm:$0xf]
    %v33 = vld [vmem:[%s1 + $0xc] sm:$0xf]
    %v34 = vld [vmem:[%s1 + $0x10] sm:$0xf]
    %v35 = vld [vmem:[%s1 + $0x14] sm:$0xf]
    %v36 = vld [vmem:[%s1 + $0x18] sm:$0xf]
    %v37 = vld [vmem:[%s1 + $0x1c] sm:$0xf]
    %v38 = vld [vmem:[%s1 + $0x20] sm:$0xf]
    %v39 = vld [vmem:[%s1 + $0x24] sm:$0xf]
    %v40 = vld [vmem:[%s1 + $0x28] sm:$0xf]
    %v41 = vld [vmem:[%s1 + $0x2c] sm:$0xf]
    %v42 = vld [vmem:[%s1 + $0x30] sm:$0xf]
    %v43 = vld [vmem:[%s1 + $0x34] sm:$0xf]
    %v44 = vld [vmem:[%s1 + $0x38] sm:$0xf]
    %v45 = vld [vmem:[%s1 + $0x3c] sm:$0xf]
    %v46 = vld [vmem:[%s1 + $0x40] sm:$0xf]
    %v47 = vld [vmem:[%s1 + $0x44] sm:$0xf]
    %v48 = vld [vmem:[%s1 + $0x48] sm:$0xf]
    %v49 = vld [vmem:[%s1 + $0x4c] sm:$0xf]
    %v50 = vld [vmem:[%s1 + $0x50] sm:$0xf]
    %v51 = vld [vmem:[%s1 + $0x54] sm:$0xf]
    %v52 = vld [vmem:[%s1 + $0x58] sm:$0xf]
    %v53 = vld [vmem:[%s1 + $0x5c] sm:$0xf]
    %v54 = vld [vmem:[%s1 + $0x60] sm:$0xf]
    %v55 = vld [vmem:[%s1 + $0x64] sm:$0xf]
    %v56 = vld [vmem:[%s1 + $0x68] sm:$0xf]
    %v57 = vld [vmem:[%s1 + $0x6c] sm:$0xf]
    %v58 = vld [vmem:[%s1 + $0x70] sm:$0xf]
    %v59 = vld [vmem:[%s1 + $0x74] sm:$0xf]
    %v60 = vld [vmem:[%s1 + $0x78] sm:$0xf]
    %v61 = vld [vmem:[%s1 + $0x7c] sm:$0xf]
    %v64 = vunpack.c.l.b16 %v28
    %v65 = vunpack.c.h.b16 %v28
    %v66 = vunpack.c.l.b16 %v29
    %v67 = vunpack.c.h.b16 %v29
    %v68 = vpack.c.b16 %v66, %v64
    %v69 = vpack.c.b16 %v67, %v65
    %v104 = vunpack.c.l.b16 %v30
    %v105 = vunpack.c.l.b16 %v31
    %v106 = vunpack.c.l.b16 %v32
    %v107 = vunpack.c.l.b16 %v33
    %v108 = vunpack.c.l.b16 %v34
    %v109 = vunpack.c.l.b16 %v35
    %v110 = vunpack.c.l.b16 %v36
    %v111 = vunpack.c.l.b16 %v37
    %v112 = vunpack.c.l.b16 %v38
    %v113 = vunpack.c.l.b16 %v39
    %v114 = vunpack.c.l.b16 %v40
    %v115 = vunpack.c.l.b16 %v41
    %v116 = vunpack.c.l.b16 %v42
    %v117 = vunpack.c.l.b16 %v43
    %v118 = vunpack.c.l.b16 %v44
    %v119 = vunpack.c.l.b16 %v45
    %v120 = vunpack.c.l.b16 %v46
    %v121 = vunpack.c.l.b16 %v47
    %v122 = vunpack.c.l.b16 %v48
    %v123 = vunpack.c.l.b16 %v49
    %v124 = vunpack.c.l.b16 %v50
    %v125 = vunpack.c.l.b16 %v51
    %v126 = vunpack.c.l.b16 %v52
    %v127 = vunpack.c.l.b16 %v53
    %v128 = vunpack.c.l.b16 %v54
    %v129 = vunpack.c.l.b16 %v55
    %v130 = vunpack.c.l.b16 %v56
    %v131 = vunpack.c.l.b16 %v57
    %v132 = vunpack.c.l.b16 %v58
    %v133 = vunpack.c.l.b16 %v59
    %v134 = vunpack.c.l.b16 %v60
    %v135 = vunpack.c.l.b16 %v61
    %v136 = vpack.c.b16 %v105, %v104
    %v137 = vpack.c.b16 %v107, %v106
    %v138 = vpack.c.b16 %v109, %v108
    %v139 = vpack.c.b16 %v111, %v110
    %v140 = vpack.c.b16 %v113, %v112
    %v141 = vpack.c.b16 %v115, %v114
    %v142 = vpack.c.b16 %v117, %v116
    %v143 = vpack.c.b16 %v119, %v118
    %v144 = vpack.c.b16 %v121, %v120
    %v145 = vpack.c.b16 %v123, %v122
    %v146 = vpack.c.b16 %v125, %v124
    %v147 = vpack.c.b16 %v127, %v126
    %v148 = vpack.c.b16 %v129, %v128
    %v149 = vpack.c.b16 %v131, %v130
    %v150 = vpack.c.b16 %v133, %v132
    %v151 = vpack.c.b16 %v135, %v134
    %168 = vmatprep.subr.bf16.mxu0 0
    %169 = vmatpush1.bf16.msra.mxu0 %v143
    %170 = vmatprep.subr.bf16.mxu0 0
    %171 = vmatpush1.bf16.msra.mxu0 %v142
    %172 = vmatprep.subr.bf16.mxu0 0
    %173 = vmatpush1.bf16.msra.mxu0 %v141
    %174 = vmatprep.subr.bf16.mxu0 0
    %175 = vmatpush1.bf16.msra.mxu0 %v140
    %176 = vmatprep.subr.bf16.mxu0 0
    %177 = vmatpush1.bf16.msra.mxu0 %v139
    %178 = vmatprep.subr.bf16.mxu0 0
    %179 = vmatpush1.bf16.msra.mxu0 %v138
    %180 = vmatprep.subr.bf16.mxu0 0
    %181 = vmatpush1.bf16.msra.mxu0 %v137
    %182 = vmatprep.subr.bf16.mxu0 0
    %183 = vmatpush1.bf16.msra.mxu0 %v136
    %184 = vmatprep.subr.bf16.mxu0 0
    %185 = vmatpush2.bf16.msra.mxu0 %v151
    %186 = vmatprep.subr.bf16.mxu0 0
    %187 = vmatpush2.bf16.msra.mxu0 %v150
    %188 = vmatprep.subr.bf16.mxu0 0
    %189 = vmatpush2.bf16.msra.mxu0 %v149
    %190 = vmatprep.subr.bf16.mxu0 0
    %191 = vmatpush2.bf16.msra.mxu0 %v148
    %192 = vmatprep.subr.bf16.mxu0 0
    %193 = vmatpush2.bf16.msra.mxu0 %v147
    %194 = vmatprep.subr.bf16.mxu0 0
    %195 = vmatpush2.bf16.msra.mxu0 %v146
    %196 = vmatprep.subr.bf16.mxu0 0
    %197 = vmatpush2.bf16.msra.mxu0 %v145
    %198 = vmatprep.subr.bf16.mxu0 0
    %199 = vmatpush2.bf16.msra.mxu0 %v144
    %200 = vmatprep.mubr.bf16.mxu0 %v69
    %201 = vmatmul.mubr.bf16.gmra.mxu0 %v68
    %v202 = vpop.f32.mrf.mxu0
    %v203 = vadd.f32 0.0, %v202
    %v204 = vpop.f32.mrf.mxu0
    %v205 = vpop.f32.mrf.mxu0
    %v206 = vadd.f32 0.0, %v205
    %v207 = vpop.f32.mrf.mxu0
    %208 = vdwg.mxu0
    %v209 = vld [vmem:[%s2] sm:$0xff]
    %v210 = vmul.f32 %v203, %v209
    %v211 = vmul.f32 %v206, %v209
    %v212 = vrot.slane %v210, 4
    %v213 = vadd.f32 %v210, %v212
    %v214 = vrot.slane %v213, 2
    %v215 = vadd.f32 %v213, %v214
    %v216 = vrot.slane %v215, 1
    %v217 = vadd.f32 %v215, %v216
    %v218 = vrot.slane %v211, 4
    %v219 = vadd.f32 %v211, %v218
    %v220 = vrot.slane %v219, 2
    %v221 = vadd.f32 %v219, %v220
    %v222 = vrot.slane %v221, 1
    %v223 = vadd.f32 %v221, %v222
    %v224 = vadd.f32 %v217, 0.0
    %v225 = vadd.f32 %v223, 0.0
    %v226 = vld [vmem:[%s3] sm:$0xf]
    %v227 = vld [vmem:[%s3 + $0x4] sm:$0xf]
    %v228 = vld [vmem:[%s4] sm:$0xf]
    %v229 = vld [vmem:[%s4 + $0x4] sm:$0xf]
    %v230 = vld [vmem:[%s4 + $0x8] sm:$0xf]
    %v231 = vld [vmem:[%s4 + $0xc] sm:$0xf]
    %v232 = vld [vmem:[%s4 + $0x10] sm:$0xf]
    %v233 = vld [vmem:[%s4 + $0x14] sm:$0xf]
    %v234 = vld [vmem:[%s4 + $0x18] sm:$0xf]
    %v235 = vld [vmem:[%s4 + $0x1c] sm:$0xf]
    %v236 = vld [vmem:[%s4 + $0x20] sm:$0xf]
    %v237 = vld [vmem:[%s4 + $0x24] sm:$0xf]
    %v238 = vld [vmem:[%s4 + $0x28] sm:$0xf]
    %v239 = vld [vmem:[%s4 + $0x2c] sm:$0xf]
    %v240 = vld [vmem:[%s4 + $0x30] sm:$0xf]
    %v241 = vld [vmem:[%s4 + $0x34] sm:$0xf]
    %v242 = vld [vmem:[%s4 + $0x38] sm:$0xf]
    %v243 = vld [vmem:[%s4 + $0x3c] sm:$0xf]
    %v246 = vunpack.c.l.b16 %v226
    %v247 = vunpack.c.l.b16 %v227
    %v248 = vpack.c.b16 %v247, %v246
    %v266 = vunpack.c.l.b16 %v228
    %v267 = vunpack.c.l.b16 %v229
    %v268 = vunpack.c.l.b16 %v230
    %v269 = vunpack.c.l.b16 %v231
    %v270 = vunpack.c.l.b16 %v232
    %v271 = vunpack.c.l.b16 %v233
    %v272 = vunpack.c.l.b16 %v234
    %v273 = vunpack.c.l.b16 %v235
    %v274 = vunpack.c.l.b16 %v236
    %v275 = vunpack.c.l.b16 %v237
    %v276 = vunpack.c.l.b16 %v238
    %v277 = vunpack.c.l.b16 %v239
    %v278 = vunpack.c.l.b16 %v240
    %v279 = vunpack.c.l.b16 %v241
    %v280 = vunpack.c.l.b16 %v242
    %v281 = vunpack.c.l.b16 %v243
    %v282 = vpack.c.b16 %v267, %v266
    %v283 = vpack.c.b16 %v269, %v268
    %v284 = vpack.c.b16 %v271, %v270
    %v285 = vpack.c.b16 %v273, %v272
    %v286 = vpack.c.b16 %v275, %v274
    %v287 = vpack.c.b16 %v277, %v276
    %v288 = vpack.c.b16 %v279, %v278
    %v289 = vpack.c.b16 %v281, %v280
    %298 = vmatprep.subr.bf16.mxu0 0
    %299 = vmatpush1.bf16.msra.mxu0 %v289
    %300 = vmatprep.subr.bf16.mxu0 0
    %301 = vmatpush1.bf16.msra.mxu0 %v288
    %302 = vmatprep.subr.bf16.mxu0 0
    %303 = vmatpush1.bf16.msra.mxu0 %v287
    %304 = vmatprep.subr.bf16.mxu0 0
    %305 = vmatpush1.bf16.msra.mxu0 %v286
    %306 = vmatprep.subr.bf16.mxu0 0
    %307 = vmatpush1.bf16.msra.mxu0 %v285
    %308 = vmatprep.subr.bf16.mxu0 0
    %309 = vmatpush1.bf16.msra.mxu0 %v284
    %310 = vmatprep.subr.bf16.mxu0 0
    %311 = vmatpush1.bf16.msra.mxu0 %v283
    %312 = vmatprep.subr.bf16.mxu0 0
    %313 = vmatpush1.bf16.msra.mxu0 %v282
    %314 = vmatprep.subr.bf16.mxu0 0
    %315 = vmatpush2.bf16.msra.mxu0 0
    %316 = vmatprep.subr.bf16.mxu0 0
    %317 = vmatpush2.bf16.msra.mxu0 0
    %318 = vmatprep.subr.bf16.mxu0 0
    %319 = vmatpush2.bf16.msra.mxu0 0
    %320 = vmatprep.subr.bf16.mxu0 0
    %321 = vmatpush2.bf16.msra.mxu0 0
    %322 = vmatprep.subr.bf16.mxu0 0
    %323 = vmatpush2.bf16.msra.mxu0 0
    %324 = vmatprep.subr.bf16.mxu0 0
    %325 = vmatpush2.bf16.msra.mxu0 0
    %326 = vmatprep.subr.bf16.mxu0 0
    %327 = vmatpush2.bf16.msra.mxu0 0
    %328 = vmatprep.subr.bf16.mxu0 0
    %329 = vmatpush2.bf16.msra.mxu0 0
    %330 = vmatprep.mubr.bf16.mxu0 0
    %331 = vmatmul.mubr.bf16.gmra.mxu0 %v248
    %v332 = vpop.f32.mrf.mxu0
    %v333 = vadd.f32 0.0, %v332
    %v334 = vpop.f32.mrf.mxu0
    %v335 = vpop.f32.mrf.mxu0
    %v336 = vadd.f32 0.0, %v335
    %v337 = vpop.f32.mrf.mxu0
    %338 = vdwg.mxu0
    %v339 = vld [vmem:[%s5] sm:$0xff]
    %v340 = vmul.f32 %v333, %v339
    %v341 = vmul.f32 %v336, %v339
    %v342 = vrot.slane %v340, 4
    %v343 = vadd.f32 %v340, %v342
    %v344 = vrot.slane %v343, 2
    %v345 = vadd.f32 %v343, %v344
    %v346 = vrot.slane %v345, 1
    %v347 = vadd.f32 %v345, %v346
    %v348 = vrot.slane %v341, 4
    %v349 = vadd.f32 %v341, %v348
    %v350 = vrot.slane %v349, 2
    %v351 = vadd.f32 %v349, %v350
    %v352 = vrot.slane %v351, 1
    %v353 = vadd.f32 %v351, %v352
    %v354 = vadd.f32 %v224, %v347
    %v355 = vadd.f32 %v225, %v353
    %v356 = vld [vmem:[%s6] sm:$0x1]
    %v358 = vlaneseq
    %v359 = vshrl.u32 %v358, 7
    %v360 = vsub.s32 0, %v359
    %v361 = vrot.slane %v356, %v360
    %v363 = vadd.f32 %v354, %v361
    %v364 = vadd.f32 %v355, %v361
    %v367 = vrot.slane %v364, 7
    %vm368 = vcmask 1041409
    %v369 = vsel %vm368, %v367, %v363
    %371 = vst [vmem:[#allocation2] sm:$0x3] %v369
    // Predicated region
    $region30: #{_lambda_.1} parent=1 // pred_check
      _
    $region31: #{_lambda_.1} parent=1 // pred_check_branch
      %373 = sbr.rel (0) target = $region33
    $region32: #{_lambda_.1} parent=1 // pred_region
      %s375 = ssub.s32 32, 32
      %376 = vsyncadd [#allocation3], %s375
      %s378 = sshll.u32 [#allocation2], 4
      %s379 = int_to_ptr.vmem [resolvable:$true] %s378
      %381 = dma.vmem_to_hbm [thread:$0]  %s379, 32, %s7, [#allocation3]
    $region33: #{_lambda_.1} parent=1 // pred_fallthru
      _
    // Predicated region
    $region34: #{_lambda_.1} parent=1 // pred_check
      _
    $region35: #{_lambda_.1} parent=1 // pred_check_branch
      %383 = sbr.rel (0) target = $region37
    $region36: #{_lambda_.1} parent=1 // pred_region
      %384 = dma.done [#allocation3], 32
    $region37: #{_lambda_.1} parent=1 // pred_fallthru
      _
    %385 = vsyncpa [#allocation3], 1

</llo_original>
